<compile_context>
chip_gen: v7x
topology: tpu7x:2x2x1
jax: 0.10.0
libtpu: 0.0.40
codegen_flags: <defaults>
</compile_context>

<pallas_src>
import math

import jax
import jax.numpy as jnp
from jax.experimental import pallas as pl
from jax.experimental.pallas import tpu as pltpu


_PALLAS_MIN_OUT_ELEMS = 1 << 15   # below this, fused XLA einsum+add beats kernel overhead
_VPU_MAX_L = 8                    # L <= 8: unrolled VPU outer product (exact f32)


def _round_up(x, m):
    return ((x + m - 1) // m) * m


def _round_down(x, m):
    return (x // m) * m


def _tpu_vmem_bytes():
    try:
        return int(pltpu.get_tpu_info().vmem_capacity_bytes)
    except Exception:
        return 64 * 1024 * 1024   # conservative (v7x-sized) default


# ---------------------------------------------------------------------------
# Pallas kernel: one (TM, TN) output tile = template_tile + coeff_tile @ bsT_tile
# ---------------------------------------------------------------------------
def _blend_kernel(coeff_ref, bsT_ref, tmpl_ref, out_ref):
    tmpl = tmpl_ref[...].astype(jnp.float32)     # (1, TN) resident or (TM, TN) per-row
    L = coeff_ref.shape[-1]
    if L <= _VPU_MAX_L:
        # Tiny contraction: unrolled VPU outer-product accumulation (exact f32).
        # Keeps the MXU (which zero-pads L to its full contraction width) off the
        # critical path for an HBM-bound kernel.
        c = coeff_ref[...].astype(jnp.float32)
        b = bsT_ref[...].astype(jnp.float32)
        acc = tmpl
        for l in range(L):
            acc = acc + c[:, l:l + 1] * b[l:l + 1, :]
        out_ref[...] = acc.astype(out_ref.dtype)
    else:
        # Default (single-pass) MXU precision: HIGHEST would ~3x MXU time and risk
        # flipping this mem-bound kernel compute-bound.
        acc = jnp.dot(coeff_ref[...], bsT_ref[...], preferred_element_type=jnp.float32)
        out_ref[...] = (tmpl + acc).astype(out_ref.dtype)


def _choose_tiles(rows, MK):
    vmem = _tpu_vmem_bytes()
    big_vmem = vmem >= (96 << 20)          # v5e / v6e: 128 MiB physical VMEM
    tm_cap = 1024 if big_vmem else 512     # v7x: 64 MiB physical -> smaller tiles
    tn_cap = 2048
    vmem_limit = (96 << 20) if big_vmem else (40 << 20)

    # Column tile: full extent when small (always a legal block), else a 128-multiple;
    # Pallas masks the ragged final column block -- no explicit padding anywhere.
    TN = MK if MK <= 256 else min(tn_cap, _round_down(MK, 128))
    # Row tile: full extent when it fits, otherwise an 8-aligned cap (ragged last block ok).
    TM = rows if rows <= tm_cap else tm_cap

    # v7x has 2 TensorCores: guarantee >= 2 programs on a "parallel" axis when possible.
    if (not big_vmem) and pl.cdiv(rows, TM) * pl.cdiv(MK, TN) < 2:
        if rows >= 16:
            TM = min(TM, _round_up(pl.cdiv(rows, 2), 8))
        elif MK >= 256:
            TN = _round_up(pl.cdiv(MK, 2), 128)
    return TM, TN, vmem_limit


def _blend_matmul(coeff2d, bsT, tmpl2d, out_dtype):
    rows, L = coeff2d.shape
    MK = bsT.shape[1]
    TM, TN, vmem_limit = _choose_tiles(rows, MK)
    grid = (pl.cdiv(rows, TM), pl.cdiv(MK, TN))

    if tmpl2d.shape[0] == 1:
        # Row-invariant template: one (1, TN) stripe per column tile, stays resident.
        tmpl_spec = pl.BlockSpec((1, TN), lambda i, j: (0, j))
    else:
        tmpl_spec = pl.BlockSpec((TM, TN), lambda i, j: (i, j))

    return pl.pallas_call(
        _blend_kernel,
        out_shape=jax.ShapeDtypeStruct((rows, MK), out_dtype),
        grid=grid,
        in_specs=[
            pl.BlockSpec((TM, L), lambda i, j: (i, 0)),   # coefficients, tiled over rows
            pl.BlockSpec((L, TN), lambda i, j: (0, j)),   # blendshape matrix, per-column stripe
            tmpl_spec,                                    # template
        ],
        out_specs=pl.BlockSpec((TM, TN), lambda i, j: (i, j)),
        compiler_params=pltpu.CompilerParams(
            dimension_semantics=("parallel", "parallel"),  # independent axes -> megacore sharding
            vmem_limit_bytes=vmem_limit,
        ),
    )(coeff2d, bsT, tmpl2d)


# ---------------------------------------------------------------------------
# Template flattening: (1, MK) when it broadcasts over all batch rows (stays
# resident in VMEM), else (rows, MK).
# ---------------------------------------------------------------------------
def _template_2d(template, lead_shape, M, K):
    MK = M * K
    t = jnp.asarray(template)
    lead_nd = max(t.ndim - 2, 0)
    if all(int(d) == 1 for d in t.shape[:lead_nd]):
        t = t.reshape(t.shape[lead_nd:])
        return jnp.broadcast_to(t, (M, K)).reshape(1, MK)
    # TODO(synk): partially-broadcast templates (e.g. (N,1,M,K) with 5-D coefficients)
    # are still materialized to (rows, MK); a compact-template index_map would avoid
    # that extra HBM pass.
    rows = math.prod(lead_shape)
    return jnp.broadcast_to(t, tuple(lead_shape) + (M, K)).reshape(rows, MK)


# ---------------------------------------------------------------------------
# Forward (matches torch BlendShapes.forward; module has no parameters)
# ---------------------------------------------------------------------------
def blendshapes_forward(template, coefficients, blendshapes, *, use_pallas=None):
    M, K, L = blendshapes.shape
    ndim = coefficients.ndim

    if ndim == 3:
        # einsum('btc,mkl->bmt') has disjoint summed indices -> factorizes into a
        # rank-1 outer product (sum_c coeff[b,t,c]) * (sum_{k,l<C} bs[m,k,l]);
        # tiny VPU work, done in plain jnp.
        out_dtype = jnp.result_type(template.dtype, coefficients.dtype, blendshapes.dtype)
        B, T, C = coefficients.shape
        csum = jnp.sum(coefficients, axis=-1)                # (B, T)
        S = jnp.sum(blendshapes[..., :C], axis=(1, 2))       # (M,)
        off_bmt = S[None, :, None] * csum[:, None, :]        # (B, M, T) == torch einsum output
        offsets = off_bmt.reshape(B, T, -1)[..., None]       # torch .view(B,T,-1).unsqueeze(-1)
        return (template + offsets).astype(out_dtype)

    if ndim == 4:
        B = coefficients.shape[0]
        lead = (B,)
        coeff2d = coefficients.reshape(B, -1)                 # (B, L)
        bs = blendshapes
        out_dtype = jnp.result_type(template.dtype, coefficients.dtype, blendshapes.dtype)
    elif ndim == 5:
        # torch loops over i writing into zeros_like(template); identical to one
        # batched matmul.  Output takes the template's dtype, as in torch.
        N, B = coefficients.shape[:2]
        lead = (N, B)
        coeff2d = coefficients.reshape(N * B, -1)             # (N*B, L)
        bs = blendshapes
        out_dtype = template.dtype
    else:  # 2-D coefficients: slice blendshapes to the first s coefficients
        B, s = coefficients.shape
        lead = (B,)
        coeff2d = coefficients
        bs = blendshapes[..., :s]
        out_dtype = jnp.result_type(template.dtype, coefficients.dtype, blendshapes.dtype)

    rows, Lc = coeff2d.shape
    MK = M * K

    if use_pallas is None:
        use_pallas = rows * MK >= _PALLAS_MIN_OUT_ELEMS
    if not use_pallas:
        # Tiny problem: per-call / per-grid-step overhead dominates; a fused XLA
        # einsum + add is faster and avoids lane-sparse stores.
        offsets = jnp.einsum("rl,mkl->rmk", coeff2d, bs)
        return (template + offsets.reshape(tuple(lead) + (M, K))).astype(out_dtype)

    # Small (L, MK) matrix; constant-folds under jit when blendshapes are static.
    bsT = bs.reshape(MK, Lc).T
    tmpl2d = _template_2d(template, lead, M, K)

    out2d = _blend_matmul(coeff2d, bsT, tmpl2d, out_dtype)     # (rows, MK) -- no pad, no slice
    return out2d.reshape(tuple(lead) + (M, K))


if __name__ == "__main__":
    key = jax.random.PRNGKey(0)
    ks = jax.random.split(key, 10)
    hi = jax.lax.Precision.HIGHEST

    # ---- small shapes (M=16, K=3, L=8): heuristic takes the fused-XLA path ----
    B, M, K, L = 2, 16, 3, 8
    bshapes = 0.1 * jax.random.normal(ks[0], (M, K, L), jnp.float32)

    template = jax.random.normal(ks[1], (B, M, K), jnp.float32)
    coeff4 = jax.random.normal(ks[2], (B, L, 1, 1), jnp.float32)
    out = jax.block_until_ready(blendshapes_forward(template, coeff4, bshapes))
    ref = template + jnp.einsum("bl,mkl->bmk", coeff4.reshape(B, -1), bshapes, precision=hi)
    assert out.shape == ref.shape and out.dtype == ref.dtype
    assert jnp.allclose(out, ref, atol=2e-2, rtol=2e-2)

    # Same case forced through Pallas (VPU outer-product path, per-row template).
    out_p = jax.block_until_ready(blendshapes_forward(template, coeff4, bshapes, use_pallas=True))
    assert jnp.allclose(out_p, ref, atol=1e-5, rtol=1e-5)

    # Row-invariant (M, K) template forced through Pallas -> resident-template stripe.
    template_mk = jax.random.normal(ks[3], (M, K), jnp.float32)
    out_ri = jax.block_until_ready(blendshapes_forward(template_mk, coeff4, bshapes, use_pallas=True))
    ref_ri = template_mk + jnp.einsum("bl,mkl->bmk", coeff4.reshape(B, -1), bshapes, precision=hi)
    assert jnp.allclose(out_ri, ref_ri, atol=1e-5, rtol=1e-5)

    # ---- 5-D coefficients (torch per-i loop == one batched matmul), forced Pallas ----
    N = 3
    template5 = jax.random.normal(ks[4], (N, B, M, K), jnp.float32)
    coeff5 = jax.random.normal(ks[5], (N, B, L, 1, 1), jnp.float32)
    out5 = jax.block_until_ready(blendshapes_forward(template5, coeff5, bshapes, use_pallas=True))
    ref5 = template5 + jnp.einsum("nbl,mkl->nbmk", coeff5.reshape(N, B, -1), bshapes, precision=hi)
    assert out5.shape == ref5.shape
    assert jnp.allclose(out5, ref5, atol=1e-5, rtol=1e-5)

    # ---- 2-D coefficients (sliced blendshapes) ----
    s = 5
    coeff2 = jax.random.normal(ks[6], (B, s), jnp.float32)
    out2 = jax.block_until_ready(blendshapes_forward(template, coeff2, bshapes))
    ref2 = template + jnp.einsum("bl,mkl->bmk", coeff2, bshapes[..., :s], precision=hi)
    assert jnp.allclose(out2, ref2, atol=2e-2, rtol=2e-2)

    # ---- 3-D coefficients (factorized outer-product path) ----
    T, C = 4, 6
    coeff3 = jax.random.normal(ks[7], (B, T, C), jnp.float32)
    template3 = jax.random.normal(ks[1], (B, T, M, 1), jnp.float32)
    out3 = jax.block_until_ready(blendshapes_forward(template3, coeff3, bshapes))
    off3 = jnp.einsum("btc,mkl->bmt", coeff3, bshapes[..., :C], precision=hi)
    ref3 = template3 + off3.reshape(B, T, -1)[..., None]
    assert out3.shape == ref3.shape
    assert jnp.allclose(out3, ref3, atol=2e-2, rtol=2e-2)

    # ---- larger case: heuristic takes the Pallas path, L > 8 -> MXU kernel,
    #      MK = 300 -> ragged final 128-multiple column block (masked boundary stores,
    #      no padding, no post-call slice) ----
    Bb, Mb, Kb, Lb = 192, 100, 3, 24
    bshapes_b = 0.05 * jax.random.normal(ks[8], (Mb, Kb, Lb), jnp.float32)
    template_b = jax.random.normal(ks[9], (Bb, Mb, Kb), jnp.float32)
    coeff_b = jax.random.normal(ks[2], (Bb, Lb, 1, 1), jnp.float32)
    out_b = jax.block_until_ready(blendshapes_forward(template_b, coeff_b, bshapes_b))
    ref_b = template_b + jnp.einsum("bl,mkl->bmk", coeff_b.reshape(Bb, -1), bshapes_b, precision=hi)
    assert out_b.shape == ref_b.shape and out_b.dtype == ref_b.dtype
    assert jnp.allclose(out_b, ref_b, atol=2e-2, rtol=2e-2)

    print("KERNEL_OK")
</pallas_src>

<mosaic_0001>
module attributes {stable_mosaic.version = 11 : i64} {
  func.func @_blend_kernel(%arg0: i32, %arg1: i32, %arg2: memref<2x8xf32, #tpu.memory_space<vmem>>, %arg3: memref<8x48xf32, #tpu.memory_space<vmem>>, %arg4: memref<2x48xf32, #tpu.memory_space<vmem>>, %arg5: memref<2x48xf32, #tpu.memory_space<vmem>>) attributes {dimension_semantics = [#tpu.dimension_semantics<parallel>, #tpu.dimension_semantics<parallel>], iteration_bounds = array<i64: 1, 1>, scalar_prefetch = 0 : i64, scratch_operands = 0 : i64, tpu.core_type = #tpu.core_type<tc>, window_params = [{transform_indices = @transform_0, window_bounds = array<i64: 2, 8>}, {transform_indices = @transform_1, window_bounds = array<i64: 8, 48>}, {transform_indices = @transform_2, window_bounds = array<i64: 2, 48>}, {transform_indices = @transform_3, window_bounds = array<i64: 2, 48>}]} {
    %c0 = arith.constant 0 : index
    %c0_0 = arith.constant 0 : index
    %0 = vector.load %arg4[%c0, %c0_0] : memref<2x48xf32, #tpu.memory_space<vmem>>, vector<2x48xf32>
    %c0_1 = arith.constant 0 : index
    %c0_2 = arith.constant 0 : index
    %1 = vector.load %arg2[%c0_1, %c0_2] : memref<2x8xf32, #tpu.memory_space<vmem>>, vector<2x8xf32>
    %c0_3 = arith.constant 0 : index
    %c0_4 = arith.constant 0 : index
    %2 = vector.load %arg3[%c0_3, %c0_4] : memref<8x48xf32, #tpu.memory_space<vmem>>, vector<8x48xf32>
    %3 = vector.extract_strided_slice %1 {offsets = [0, 0], sizes = [2, 1], strides = [1, 1]} : vector<2x8xf32> to vector<2x1xf32>
    %4 = vector.extract_strided_slice %2 {offsets = [0, 0], sizes = [1, 48], strides = [1, 1]} : vector<8x48xf32> to vector<1x48xf32>
    %5 = vector.broadcast %3 : vector<2x1xf32> to vector<2x48xf32>
    %6 = vector.broadcast %4 : vector<1x48xf32> to vector<2x48xf32>
    %7 = arith.mulf %5, %6 : vector<2x48xf32>
    %8 = arith.addf %0, %7 : vector<2x48xf32>
    %9 = vector.extract_strided_slice %1 {offsets = [0, 1], sizes = [2, 1], strides = [1, 1]} : vector<2x8xf32> to vector<2x1xf32>
    %10 = vector.extract_strided_slice %2 {offsets = [1, 0], sizes = [1, 48], strides = [1, 1]} : vector<8x48xf32> to vector<1x48xf32>
    %11 = vector.broadcast %9 : vector<2x1xf32> to vector<2x48xf32>
    %12 = vector.broadcast %10 : vector<1x48xf32> to vector<2x48xf32>
    %13 = arith.mulf %11, %12 : vector<2x48xf32>
    %14 = arith.addf %8, %13 : vector<2x48xf32>
    %15 = vector.extract_strided_slice %1 {offsets = [0, 2], sizes = [2, 1], strides = [1, 1]} : vector<2x8xf32> to vector<2x1xf32>
    %16 = vector.extract_strided_slice %2 {offsets = [2, 0], sizes = [1, 48], strides = [1, 1]} : vector<8x48xf32> to vector<1x48xf32>
    %17 = vector.broadcast %15 : vector<2x1xf32> to vector<2x48xf32>
    %18 = vector.broadcast %16 : vector<1x48xf32> to vector<2x48xf32>
    %19 = arith.mulf %17, %18 : vector<2x48xf32>
    %20 = arith.addf %14, %19 : vector<2x48xf32>
    %21 = vector.extract_strided_slice %1 {offsets = [0, 3], sizes = [2, 1], strides = [1, 1]} : vector<2x8xf32> to vector<2x1xf32>
    %22 = vector.extract_strided_slice %2 {offsets = [3, 0], sizes = [1, 48], strides = [1, 1]} : vector<8x48xf32> to vector<1x48xf32>
    %23 = vector.broadcast %21 : vector<2x1xf32> to vector<2x48xf32>
    %24 = vector.broadcast %22 : vector<1x48xf32> to vector<2x48xf32>
    %25 = arith.mulf %23, %24 : vector<2x48xf32>
    %26 = arith.addf %20, %25 : vector<2x48xf32>
    %27 = vector.extract_strided_slice %1 {offsets = [0, 4], sizes = [2, 1], strides = [1, 1]} : vector<2x8xf32> to vector<2x1xf32>
    %28 = vector.extract_strided_slice %2 {offsets = [4, 0], sizes = [1, 48], strides = [1, 1]} : vector<8x48xf32> to vector<1x48xf32>
    %29 = vector.broadcast %27 : vector<2x1xf32> to vector<2x48xf32>
    %30 = vector.broadcast %28 : vector<1x48xf32> to vector<2x48xf32>
    %31 = arith.mulf %29, %30 : vector<2x48xf32>
    %32 = arith.addf %26, %31 : vector<2x48xf32>
    %33 = vector.extract_strided_slice %1 {offsets = [0, 5], sizes = [2, 1], strides = [1, 1]} : vector<2x8xf32> to vector<2x1xf32>
    %34 = vector.extract_strided_slice %2 {offsets = [5, 0], sizes = [1, 48], strides = [1, 1]} : vector<8x48xf32> to vector<1x48xf32>
    %35 = vector.broadcast %33 : vector<2x1xf32> to vector<2x48xf32>
    %36 = vector.broadcast %34 : vector<1x48xf32> to vector<2x48xf32>
    %37 = arith.mulf %35, %36 : vector<2x48xf32>
    %38 = arith.addf %32, %37 : vector<2x48xf32>
    %39 = vector.extract_strided_slice %1 {offsets = [0, 6], sizes = [2, 1], strides = [1, 1]} : vector<2x8xf32> to vector<2x1xf32>
    %40 = vector.extract_strided_slice %2 {offsets = [6, 0], sizes = [1, 48], strides = [1, 1]} : vector<8x48xf32> to vector<1x48xf32>
    %41 = vector.broadcast %39 : vector<2x1xf32> to vector<2x48xf32>
    %42 = vector.broadcast %40 : vector<1x48xf32> to vector<2x48xf32>
    %43 = arith.mulf %41, %42 : vector<2x48xf32>
    %44 = arith.addf %38, %43 : vector<2x48xf32>
    %45 = vector.extract_strided_slice %1 {offsets = [0, 7], sizes = [2, 1], strides = [1, 1]} : vector<2x8xf32> to vector<2x1xf32>
    %46 = vector.extract_strided_slice %2 {offsets = [7, 0], sizes = [1, 48], strides = [1, 1]} : vector<8x48xf32> to vector<1x48xf32>
    %47 = vector.broadcast %45 : vector<2x1xf32> to vector<2x48xf32>
    %48 = vector.broadcast %46 : vector<1x48xf32> to vector<2x48xf32>
    %49 = arith.mulf %47, %48 : vector<2x48xf32>
    %50 = arith.addf %44, %49 : vector<2x48xf32>
    %c0_5 = arith.constant 0 : index
    %c0_6 = arith.constant 0 : index
    %51 = vector.load %arg5[%c0_5, %c0_6] : memref<2x48xf32, #tpu.memory_space<vmem>>, vector<2x48xf32>
    tpu.vector_store %arg5[%c0_5, %c0_6], %50 {strides = array<i32>} : memref<2x48xf32, #tpu.memory_space<vmem>>, vector<2x48xf32>,
    return
  }
  func.func @transform_0(%arg0: i32, %arg1: i32) -> (i32, i32) {
    %c0_i32 = arith.constant 0 : i32
    %c0_i32_0 = arith.constant 0 : i32
    return %arg0, %c0_i32 : i32, i32
  }
  func.func @transform_1(%arg0: i32, %arg1: i32) -> (i32, i32) {
    %c0_i32 = arith.constant 0 : i32
    %c0_i32_0 = arith.constant 0 : i32
    return %c0_i32, %arg1 : i32, i32
  }
  func.func @transform_2(%arg0: i32, %arg1: i32) -> (i32, i32) {
    %c0_i32 = arith.constant 0 : i32
    return %arg0, %arg1 : i32, i32
  }
  func.func @transform_3(%arg0: i32, %arg1: i32) -> (i32, i32) {
    %c0_i32 = arith.constant 0 : i32
    return %arg0, %arg1 : i32, i32
  }
}

</mosaic_0001>

<llo_original>
// kernel: tpu_custom_call.1
$region0: #{tpu_custom_call.1}
  #allocation0 [shape = 'u32[]', space=smem, size = 0x4, offset = 0x4, fixed_abs, tag = 'smem constant byte address 0x4 - core index']
  #allocation1 [shape = 'u32[144,128]{1,0:T(1,128)}', space=vmem, size = 0x12000, scoped, tag = 'internal scratch']
  %s0 = inlined_call_operand.hbm [shape: f32[2,8], index: 0, kind: input, shape index: {}]
  %s1 = inlined_call_operand.hbm [shape: f32[8,48], index: 1, kind: input, shape index: {}]
  %s2 = inlined_call_operand.vmem [shape: f32[2,48], index: 2, kind: input, shape index: {}]
  %s3 = inlined_call_operand.hbm [shape: f32[2,48], index: 3, kind: output, shape index: {}]
  %s4 = sld [smem:[#allocation0]]
  $region30: #{tpu_custom_call.1} parent=0
    _
  %s6 = ssub.s32 1, %s4
  %s7 = scalar_select 0, %s6, %s4
  $region1: #{tpu_custom_call.1} parent=0
    #allocation2 [shape = 'u8[1024]{0}', space=vmem, size = 0x400, scoped, tag = 'input window, operand 0, single buffered']
    #allocation3 [shape = 's32[1]{0}', space=sflag, size = 0x4, scoped, tag = 'scoped memory for tpu_custom_call.1']
    #allocation4 [shape = 's32[1]{0}', space=sflag, size = 0x4, scoped, tag = 'scoped memory for tpu_custom_call.1']
    #allocation5 [shape = 'u8[4096]{0}', space=vmem, size = 0x1000, scoped, tag = 'input window, operand 1, single buffered']
    #allocation6 [shape = 's32[1]{0}', space=sflag, size = 0x4, scoped, tag = 'scoped memory for tpu_custom_call.1']
    #allocation7 [shape = 'u8[1024]{0}', space=vmem, size = 0x400, scoped, tag = 'output window, operand 0, single buffered']
    %8 = vsyncpa [#allocation3], 0
    %9 = vsyncpa [#allocation6], 0
    %10 = vsyncpa [#allocation4], 0
    // Predicated region
    $region2: #{tpu_custom_call.1} parent=1 // pred_check
      _
    $region3: #{tpu_custom_call.1} parent=1 // pred_check_branch
      %12 = sbr.rel (0) target = $region5
    $region4: #{tpu_custom_call.1} parent=1 // pred_region
      %s14 = ssub.s32 32, 32
      %15 = vsyncadd [#allocation3], %s14
      %s17 = sshll.u32 [#allocation2], 4
      %s18 = int_to_ptr.vmem [resolvable:$true] %s17
      %20 = dma.hbm_to_vmem [thread:$0]  %s0, 32, %s18, [#allocation3]
    $region5: #{tpu_custom_call.1} parent=1 // pred_fallthru
      _
    // Predicated region
    $region6: #{tpu_custom_call.1} parent=1 // pred_check
      _
    $region7: #{tpu_custom_call.1} parent=1 // pred_check_branch
      %22 = sbr.rel (0) target = $region9
    $region8: #{tpu_custom_call.1} parent=1 // pred_region
      %s24 = ssub.s32 128, 128
      %25 = vsyncadd [#allocation6], %s24
      %s27 = sshll.u32 [#allocation5], 4
      %s28 = int_to_ptr.vmem [resolvable:$true] %s27
      %30 = dma.hbm_to_vmem [thread:$0]  %s1, 128, %s28, [#allocation6]
    $region9: #{tpu_custom_call.1} parent=1 // pred_fallthru
      _
    // Predicated region
    $region10: #{tpu_custom_call.1} parent=1 // pred_check
      _
    $region11: #{tpu_custom_call.1} parent=1 // pred_check_branch
      %32 = sbr.rel (0) target = $region13
    $region12: #{tpu_custom_call.1} parent=1 // pred_region
      _
    $region13: #{tpu_custom_call.1} parent=1 // pred_fallthru
      _
    // Predicated region
    $region14: #{tpu_custom_call.1} parent=1 // pred_check
      _
    $region15: #{tpu_custom_call.1} parent=1 // pred_check_branch
      %34 = sbr.rel (0) target = $region17
    $region16: #{tpu_custom_call.1} parent=1 // pred_region
      %35 = dma.done [#allocation3], 32
    $region17: #{tpu_custom_call.1} parent=1 // pred_fallthru
      _
    // Predicated region
    $region18: #{tpu_custom_call.1} parent=1 // pred_check
      _
    $region19: #{tpu_custom_call.1} parent=1 // pred_check_branch
      %37 = sbr.rel (0) target = $region21
    $region20: #{tpu_custom_call.1} parent=1 // pred_region
      %38 = dma.done [#allocation6], 128
    $region21: #{tpu_custom_call.1} parent=1 // pred_fallthru
      _
    %v39 = vld [vmem:[%s2] sm:$0x3]
    %v40 = vld [vmem:[#allocation2] sm:$0x3]
    %v41 = vld [vmem:[#allocation5] sm:$0xff]
    %43 = vset.pattern.permute.xlu0 0
    %44 = vperm.xlu0 %43, %v40
    %v45 = vpop.permute.xlu0 %44
    %v47 = vlaneseq
    %v48 = vshrl.u32 %v47, 7
    %v49 = vsub.s32 0, %v48
    %v50 = vrot.slane %v41, %v49
    %v51 = vmul.f32 %v45, %v50
    %v52 = vadd.f32 %v39, %v51
    %53 = vset.pattern.permute.xlu0 1
    %54 = vperm.xlu0 %53, %v40
    %v55 = vpop.permute.xlu0 %54
    %v57 = vlaneseq
    %v58 = vshrl.u32 %v57, 7
    %v59 = vsub.s32 1, %v58
    %v60 = vrot.slane %v41, %v59
    %v61 = vmul.f32 %v55, %v60
    %v62 = vadd.f32 %v52, %v61
    %63 = vset.pattern.permute.xlu0 2
    %64 = vperm.xlu0 %63, %v40
    %v65 = vpop.permute.xlu0 %64
    %v67 = vlaneseq
    %v68 = vshrl.u32 %v67, 7
    %v69 = vsub.s32 2, %v68
    %v70 = vrot.slane %v41, %v69
    %v71 = vmul.f32 %v65, %v70
    %v72 = vadd.f32 %v62, %v71
    %73 = vset.pattern.permute.xlu0 3
    %74 = vperm.xlu0 %73, %v40
    %v75 = vpop.permute.xlu0 %74
    %v77 = vlaneseq
    %v78 = vshrl.u32 %v77, 7
    %v79 = vsub.s32 3, %v78
    %v80 = vrot.slane %v41, %v79
    %v81 = vmul.f32 %v75, %v80
    %v82 = vadd.f32 %v72, %v81
    %83 = vset.pattern.permute.xlu0 4
    %84 = vperm.xlu0 %83, %v40
    %v85 = vpop.permute.xlu0 %84
    %v87 = vlaneseq
    %v88 = vshrl.u32 %v87, 7
    %v89 = vsub.s32 4, %v88
    %v90 = vrot.slane %v41, %v89
    %v91 = vmul.f32 %v85, %v90
    %v92 = vadd.f32 %v82, %v91
    %93 = vset.pattern.permute.xlu0 5
    %94 = vperm.xlu0 %93, %v40
    %v95 = vpop.permute.xlu0 %94
    %v97 = vlaneseq
    %v98 = vshrl.u32 %v97, 7
    %v99 = vsub.s32 5, %v98
    %v100 = vrot.slane %v41, %v99
    %v101 = vmul.f32 %v95, %v100
    %v102 = vadd.f32 %v92, %v101
    %103 = vset.pattern.permute.xlu0 6
    %104 = vperm.xlu0 %103, %v40
    %v105 = vpop.permute.xlu0 %104
    %v107 = vlaneseq
    %v108 = vshrl.u32 %v107, 7
    %v109 = vsub.s32 6, %v108
    %v110 = vrot.slane %v41, %v109
    %v111 = vmul.f32 %v105, %v110
    %v112 = vadd.f32 %v102, %v111
    %113 = vset.pattern.permute.xlu0 7
    %114 = vperm.xlu0 %113, %v40
    %v115 = vpop.permute.xlu0 %114
    %v117 = vlaneseq
    %v118 = vshrl.u32 %v117, 7
    %v119 = vsub.s32 7, %v118
    %v120 = vrot.slane %v41, %v119
    %v121 = vmul.f32 %v115, %v120
    %v122 = vadd.f32 %v112, %v121
    %vm123 = vcmask 386048
    %124 = vst.msk [vmem:[#allocation7] sm:$0x3] %vm123, %v122
    // Predicated region
    $region22: #{tpu_custom_call.1} parent=1 // pred_check
      _
    $region23: #{tpu_custom_call.1} parent=1 // pred_check_branch
      %126 = sbr.rel (0) target = $region25
    $region24: #{tpu_custom_call.1} parent=1 // pred_region
      %s128 = ssub.s32 32, 32
      %129 = vsyncadd [#allocation4], %s128
      %s131 = sshll.u32 [#allocation7], 4
      %s132 = int_to_ptr.vmem [resolvable:$true] %s131
      %134 = dma.vmem_to_hbm [thread:$0]  %s132, 32, %s3, [#allocation4]
    $region25: #{tpu_custom_call.1} parent=1 // pred_fallthru
      _
    // Predicated region
    $region26: #{tpu_custom_call.1} parent=1 // pred_check
      _
    $region27: #{tpu_custom_call.1} parent=1 // pred_check_branch
      %136 = sbr.rel (0) target = $region29
    $region28: #{tpu_custom_call.1} parent=1 // pred_region
      %137 = dma.done [#allocation4], 32
    $region29: #{tpu_custom_call.1} parent=1 // pred_fallthru
      _
    %138 = vsyncpa [#allocation3], 1
    %139 = vsyncpa [#allocation6], 1
    %140 = vsyncpa [#allocation4], 1

</llo_original>
